<compile_context>
chip_gen: v7x
topology: tpu7x:2x2x1
jax: 0.10.0
libtpu: 0.0.40
codegen_flags: <defaults>
</compile_context>

<pallas_src>
import functools

import jax
import jax.numpy as jnp
from jax.experimental import pallas as pl
from jax.experimental.pallas import tpu as pltpu


def _label_smoothing_kernel(pred_ref, tgt_ref, out_ref, *,
                            smoothing: float, total_n: int, tile_n: int):
    i = pl.program_id(0)

    p = pred_ref[...].astype(jnp.float32)              # (TN, C) f32
    c = p.shape[-1]
    confidence = 1.0 - smoothing
    off = smoothing / (c - 1)

    # Numerically stable pieces of log_softmax (never materialize logp).
    m = jnp.max(p, axis=-1, keepdims=True)              # (TN, 1)
    z = p - m                                            # (TN, C)
    lse = jnp.log(jnp.sum(jnp.exp(z), axis=-1, keepdims=True))  # (TN, 1)

    # Smoothed one-hot weights via iota==target compare (scatter_ equivalent).
    # Since the weights sum to exactly 1 per row:
    #   per_row = -sum_c w_c * (z_c - lse) = lse - sum_c(w_c * z_c)
    tgt = tgt_ref[...]                                   # (TN, 1) int32
    col = jax.lax.broadcasted_iota(jnp.int32, z.shape, 1)
    w = jnp.where(col == tgt, confidence, off)           # (TN, C)
    dot = jnp.sum(w * z, axis=-1, keepdims=True)         # (TN, 1)

    per_row = lse - dot                                   # (TN, 1)

    # Mask rows past the true batch size (ragged last tile reads garbage).
    row = i * tile_n + jax.lax.broadcasted_iota(jnp.int32, per_row.shape, 0)
    per_row = jnp.where(row < total_n, per_row, 0.0)

    # One partial sum per grid step (parallel axis; reduced outside).
    out_ref[...] = jnp.sum(per_row, axis=(0, 1), keepdims=True)[None]


def label_smoothing_loss(pred: jax.Array, target: jax.Array,
                         smoothing: float = 0.0, *,
                         tile_n: int | None = None,
                         vmem_limit_bytes: int = 48 * 1024 * 1024) -> jax.Array:
    """pred: (N, C) float logits (f32 or bf16); target: (N,) int class ids.

    Returns the scalar mean smoothed cross-entropy (PyTorch LabelSmoothingLoss
    forward semantics: off-value = smoothing / (classes - 1)).
    """
    n, c = pred.shape

    if tile_n is None:
        # ~6 MiB budget for one f32 copy of the logits tile; with input
        # double-buffering + a few f32 temporaries this stays well below the
        # 48 MiB scoped-VMEM limit (headroom even on v7x's 64 MiB VMEM).
        budget = 6 * 1024 * 1024
        max_rows = max(8, budget // (c * 4))
        tile_n = min(n, max_rows, 1024)
    tile_n = min(tile_n, n)
    if tile_n < n:
        # Keep the sublane (second-to-last) block dim a multiple of 8.
        tile_n = max(8, (tile_n // 8) * 8)

    num_tiles = pl.cdiv(n, tile_n)
    tgt2d = target.astype(jnp.int32).reshape(n, 1)

    kernel = functools.partial(_label_smoothing_kernel,
                               smoothing=float(smoothing),
                               total_n=n, tile_n=tile_n)

    partials = pl.pallas_call(
        kernel,
        out_shape=jax.ShapeDtypeStruct((num_tiles, 1, 1), jnp.float32),
        grid_spec=pltpu.PrefetchScalarGridSpec(
            num_scalar_prefetch=0,
            grid=(num_tiles,),
            in_specs=[
                pl.BlockSpec((tile_n, c), lambda i: (i, 0)),   # logits tile
                pl.BlockSpec((tile_n, 1), lambda i: (i, 0)),   # target tile
            ],
            # One (1,1,1) partial-sum block per grid step.
            out_specs=pl.BlockSpec((1, 1, 1), lambda i: (i, 0, 0)),
        ),
        compiler_params=pltpu.CompilerParams(
            dimension_semantics=("parallel",),   # independent per-tile partials
            vmem_limit_bytes=vmem_limit_bytes,
        ),
    )(pred, tgt2d)

    return jnp.sum(partials) / n


def _reference(pred, target, smoothing):
    # pure-JAX reference mirroring the PyTorch module
    logp = jax.nn.log_softmax(pred.astype(jnp.float32), axis=-1)
    n, c = pred.shape
    confidence = 1.0 - smoothing
    true_dist = jnp.full((n, c), smoothing / (c - 1), jnp.float32)
    true_dist = true_dist.at[jnp.arange(n), target].set(confidence)
    return jnp.mean(jnp.sum(-true_dist * logp, axis=-1))


if __name__ == "__main__":
    key = jax.random.PRNGKey(0)
    smoothing = 0.1

    # Test 1: f32 logits, tile covers the whole (small) batch.
    N, C = 16, 32
    k1, k2 = jax.random.split(key)
    pred = jax.random.normal(k1, (N, C), dtype=jnp.float32)
    target = jax.random.randint(k2, (N,), 0, C, dtype=jnp.int32)

    loss = jax.block_until_ready(label_smoothing_loss(pred, target, smoothing))
    ref = _reference(pred, target, smoothing)
    assert jnp.allclose(loss, ref, atol=1e-5, rtol=1e-5), (loss, ref)

    # Test 2: ragged batch (N not a multiple of the tile) exercising the mask.
    N2 = 13
    k3, k4 = jax.random.split(k1)
    pred2 = jax.random.normal(k3, (N2, C), dtype=jnp.float32)
    target2 = jax.random.randint(k4, (N2,), 0, C, dtype=jnp.int32)
    loss2 = jax.block_until_ready(
        label_smoothing_loss(pred2, target2, smoothing, tile_n=8))
    ref2 = _reference(pred2, target2, smoothing)
    assert jnp.allclose(loss2, ref2, atol=1e-5, rtol=1e-5), (loss2, ref2)

    # Test 3: bf16 logits in HBM (bandwidth path); math is still f32 in-kernel.
    pred_bf16 = pred.astype(jnp.bfloat16)
    loss3 = jax.block_until_ready(
        label_smoothing_loss(pred_bf16, target, smoothing))
    ref3 = _reference(pred_bf16.astype(jnp.float32), target, smoothing)
    assert jnp.allclose(loss3, ref3, atol=1e-4, rtol=1e-4), (loss3, ref3)

    # Test 4: smoothing = 0 (pure one-hot cross-entropy path).
    loss4 = jax.block_until_ready(label_smoothing_loss(pred, target, 0.0))
    ref4 = _reference(pred, target, 0.0)
    assert jnp.allclose(loss4, ref4, atol=1e-5, rtol=1e-5), (loss4, ref4)

    print("KERNEL_OK")
</pallas_src>

<mosaic_0001>
module attributes {stable_mosaic.version = 11 : i64} {
  func.func @_label_smoothing_kernel(%arg0: i32, %arg1: memref<16x32xf32, #tpu.memory_space<vmem>>, %arg2: memref<16x1xi32, #tpu.memory_space<vmem>>, %arg3: memref<1x1x1xf32, #tpu.memory_space<vmem>>) attributes {dimension_semantics = [#tpu.dimension_semantics<parallel>], iteration_bounds = array<i64: 1>, scalar_prefetch = 0 : i64, scratch_operands = 0 : i64, tpu.core_type = #tpu.core_type<tc>, window_params = [{transform_indices = @transform_0, window_bounds = array<i64: 16, 32>}, {transform_indices = @transform_1, window_bounds = array<i64: 16, 1>}, {transform_indices = @transform_2, window_bounds = array<i64: 1, 1, 1>}]} {
    %c0 = arith.constant 0 : index
    %c0_0 = arith.constant 0 : index
    %0 = vector.load %arg1[%c0, %c0_0] : memref<16x32xf32, #tpu.memory_space<vmem>>, vector<16x32xf32>
    %cst = arith.constant dense<0xFF800000> : vector<16xf32>
    %1 = vector.multi_reduction <maximumf>, %0, %cst [1] : vector<16x32xf32> to vector<16xf32>
    %2 = vector.shape_cast %1 : vector<16xf32> to vector<16x1xf32>
    %3 = vector.broadcast %2 : vector<16x1xf32> to vector<16x32xf32>
    %4 = arith.subf %0, %3 : vector<16x32xf32>
    %5 = math.exp %4 : vector<16x32xf32>
    %cst_1 = arith.constant dense<0.000000e+00> : vector<16xf32>
    %6 = vector.multi_reduction <add>, %5, %cst_1 [1] : vector<16x32xf32> to vector<16xf32>
    %7 = vector.shape_cast %6 : vector<16xf32> to vector<16x1xf32>
    %8 = math.log %7 : vector<16x1xf32>
    %c0_2 = arith.constant 0 : index
    %c0_3 = arith.constant 0 : index
    %9 = vector.load %arg2[%c0_2, %c0_3] : memref<16x1xi32, #tpu.memory_space<vmem>>, vector<16x1xi32>
    %10 = tpu.iota {dimensions = array<i32: 1>} : vector<16x32xi32>
    %11 = vector.broadcast %9 : vector<16x1xi32> to vector<16x32xi32>
    %12 = arith.cmpi eq, %10, %11 : vector<16x32xi32>
    %cst_4 = arith.constant 0.899999976 : f32
    %cst_5 = arith.constant 0.0032258064 : f32
    %13 = vector.broadcast %cst_4 : f32 to vector<16x32xf32>
    %14 = vector.broadcast %cst_5 : f32 to vector<16x32xf32>
    %15 = arith.select %12, %13, %14 : vector<16x32xi1>, vector<16x32xf32>
    %16 = arith.mulf %15, %4 : vector<16x32xf32>
    %cst_6 = arith.constant dense<0.000000e+00> : vector<16xf32>
    %17 = vector.multi_reduction <add>, %16, %cst_6 [1] : vector<16x32xf32> to vector<16xf32>
    %18 = vector.shape_cast %17 : vector<16xf32> to vector<16x1xf32>
    %19 = arith.subf %8, %18 : vector<16x1xf32>
    %c16_i32 = arith.constant 16 : i32
    %20 = arith.muli %arg0, %c16_i32 : i32
    %21 = tpu.iota {dimensions = array<i32: 0>} : vector<16x1xi32>
    %22 = vector.broadcast %20 : i32 to vector<16x1xi32>
    %23 = arith.addi %22, %21 : vector<16x1xi32>
    %c16_i32_7 = arith.constant 16 : i32
    %24 = vector.broadcast %c16_i32_7 : i32 to vector<16x1xi32>
    %25 = arith.cmpi slt, %23, %24 : vector<16x1xi32>
    %cst_8 = arith.constant 0.000000e+00 : f32
    %26 = vector.broadcast %cst_8 : f32 to vector<16x1xf32>
    %27 = arith.select %25, %19, %26 : vector<16x1xi1>, vector<16x1xf32>
    %28 = vector.shape_cast %27 : vector<16x1xf32> to vector<1x16x1xf32>
    %cst_9 = arith.constant dense<0.000000e+00> : vector<1xf32>
    %29 = vector.multi_reduction <add>, %28, %cst_9 [1, 2] : vector<1x16x1xf32> to vector<1xf32>
    %30 = vector.shape_cast %29 : vector<1xf32> to vector<1x1x1xf32>
    %31 = vector.extract %30[0, 0, 0] : f32 from vector<1x1x1xf32>
    %32 = vector.broadcast %31 : f32 to vector<1x1xf32>
    %33 = vector.shape_cast %32 : vector<1x1xf32> to vector<1x1x1xf32>
    %c0_10 = arith.constant 0 : index
    %c0_11 = arith.constant 0 : index
    %c0_12 = arith.constant 0 : index
    %34 = vector.load %arg3[%c0_10, %c0_11, %c0_12] : memref<1x1x1xf32, #tpu.memory_space<vmem>>, vector<1x1x1xf32>
    tpu.vector_store %arg3[%c0_10, %c0_11, %c0_12], %33 {strides = array<i32>} : memref<1x1x1xf32, #tpu.memory_space<vmem>>, vector<1x1x1xf32>,
    return
  }
  func.func @transform_0(%arg0: i32) -> (i32, i32) {
    %c0_i32 = arith.constant 0 : i32
    %c0_i32_0 = arith.constant 0 : i32
    return %arg0, %c0_i32 : i32, i32
  }
  func.func @transform_1(%arg0: i32) -> (i32, i32) {
    %c0_i32 = arith.constant 0 : i32
    %c0_i32_0 = arith.constant 0 : i32
    return %arg0, %c0_i32 : i32, i32
  }
  func.func @transform_2(%arg0: i32) -> (i32, i32, i32) {
    %c0_i32 = arith.constant 0 : i32
    %c0_i32_0 = arith.constant 0 : i32
    %c0_i32_1 = arith.constant 0 : i32
    return %arg0, %c0_i32, %c0_i32_0 : i32, i32, i32
  }
}

</mosaic_0001>

<llo_original>
// kernel: tpu_custom_call.1
$region0: #{tpu_custom_call.1}
  #allocation0 [shape = 'u32[]', space=smem, size = 0x4, offset = 0x4, fixed_abs, tag = 'smem constant byte address 0x4 - core index']
  #allocation1 [shape = 'u32[144,128]{1,0:T(1,128)}', space=vmem, size = 0x12000, scoped, tag = 'internal scratch']
  %s0 = inlined_call_operand.vmem [shape: f32[16,32], index: 0, kind: input, shape index: {}]
  %s1 = inlined_call_operand.vmem [shape: s32[16,1], index: 1, kind: input, shape index: {}]
  %s2 = inlined_call_operand.hbm [shape: f32[1,1,1], index: 2, kind: output, shape index: {}]
  %s3 = sld [smem:[#allocation0]]
  $region18: #{tpu_custom_call.1} parent=0
    _
  %s5 = ssub.s32 1, %s3
  %s6 = scalar_select 0, %s5, %s3
  $region1: #{tpu_custom_call.1} parent=0
    #allocation2 [shape = 'u8[512]{0}', space=vmem, size = 0x400, scoped, tag = 'output window, operand 0, single buffered']
    #allocation3 [shape = 's32[1]{0}', space=sflag, size = 0x4, scoped, tag = 'scoped memory for tpu_custom_call.1']
    %7 = vsyncpa [#allocation3], 0
    // Predicated region
    $region2: #{tpu_custom_call.1} parent=1 // pred_check
      _
    $region3: #{tpu_custom_call.1} parent=1 // pred_check_branch
      %9 = sbr.rel (0) target = $region5
    $region4: #{tpu_custom_call.1} parent=1 // pred_region
      _
    $region5: #{tpu_custom_call.1} parent=1 // pred_fallthru
      _
    // Predicated region
    $region6: #{tpu_custom_call.1} parent=1 // pred_check
      _
    $region7: #{tpu_custom_call.1} parent=1 // pred_check_branch
      %11 = sbr.rel (0) target = $region9
    $region8: #{tpu_custom_call.1} parent=1 // pred_region
      _
    $region9: #{tpu_custom_call.1} parent=1 // pred_fallthru
      _
    %v12 = vld [vmem:[%s0] sm:$0xff]
    %v13 = vld [vmem:[%s0 + $0x8] sm:$0xff]
    %vm14 = vcmask 261120
    %v15 = vsel %vm14, %v12, -inf
    %16 = vmax.xlane.f32.xlu0 %v15
    %v17 = vpop.xlane.xlu0 %16
    %v18 = vsel %vm14, %v13, -inf
    %19 = vmax.xlane.f32.xlu0 %v18
    %v20 = vpop.xlane.xlu0 %19
    %v21 = vsub.f32 %v12, %v17
    %v22 = vsub.f32 %v13, %v20
    %v23 = vmul.f32 %v21, 1.442695
    %v24 = vpow.pop %v23
    %v25 = vmul.f32 %v22, 1.442695
    %v26 = vpow.pop %v25
    %v27 = vsel %vm14, %v24, 0.0
    %28 = vadd.xlane.f32.xlu0 %v27
    %v29 = vpop.xlane.xlu0 %28
    %v30 = vsel %vm14, %v26, 0.0
    %31 = vadd.xlane.f32.xlu0 %v30
    %v32 = vpop.xlane.xlu0 %31
    %v33 = vlog2.pop %v29
    %v34 = vmul.f32 %v33, 0.6931472
    %v35 = vlog2.pop %v32
    %v36 = vmul.f32 %v35, 0.6931472
    %v37 = vld [vmem:[%s1] sm:$0xff]
    %v38 = vld [vmem:[%s1 + $0x8] sm:$0xff]
    %v39 = vlaneseq
    %v40 = vand.u32 %v39, 127
    %41 = vset.pattern.permute.xlu0 0
    %42 = vperm.xlu0 %41, %v37
    %v43 = vpop.permute.xlu0 %42
    %44 = vset.pattern.permute.xlu0 0
    %45 = vperm.xlu0 %44, %v38
    %v46 = vpop.permute.xlu0 %45
    %vm47 = vcmp.eq.s32.totalorder %v40, %v43
    %vm48 = vcmp.eq.s32.totalorder %v40, %v46
    %v49 = vsel %vm47, 0.9, 0.0032258064
    %v50 = vsel %vm48, 0.9, 0.0032258064
    %v51 = vmul.f32 %v49, %v21
    %v52 = vmul.f32 %v50, %v22
    %v53 = vsel %vm14, %v51, 0.0
    %54 = vadd.xlane.f32.xlu0 %v53
    %v55 = vpop.xlane.xlu0 %54
    %v56 = vsel %vm14, %v52, 0.0
    %57 = vadd.xlane.f32.xlu0 %v56
    %v58 = vpop.xlane.xlu0 %57
    %v59 = vsub.f32 %v34, %v55
    %v60 = vsub.f32 %v36, %v58
    %s61 = smul.u32 0, 16
    %v62 = vlaneseq
    %v63 = vshrl.u32 %v62, 7
    %v64 = vadd.s32 %v63, 8
    %v65 = vstv %s61
    %v66 = vadd.s32 %v65, %v63
    %v67 = vadd.s32 %v65, %v64
    %vm68 = vcmp.lt.s32.totalorder %v66, 16
    %vm69 = vcmp.lt.s32.totalorder %v67, 16
    %v70 = vsel %vm68, %v59, 0.0
    %v71 = vsel %vm69, %v60, 0.0
    %vm72 = vcmask 7168
    %v73 = vsel %vm72, %v70, 0.0
    %v74 = vsel %vm72, %v71, 0.0
    %v75 = vadd.f32 %v73, %v74
    %76 = vadd.xlane.f32.xlu0 %v75
    %v77 = vpop.xlane.xlu0 %76
    %v78 = vrot.slane %v77, 4
    %v79 = vadd.f32 %v77, %v78
    %v80 = vrot.slane %v79, 2
    %v81 = vadd.f32 %v79, %v80
    %v82 = vrot.slane %v81, 1
    %v83 = vadd.f32 %v81, %v82
    %s84 = vtos %v83
    %v85 = vstv %s84
    %vm86 = vcmask 0
    %87 = vst.msk [vmem:[#allocation2] sm:$0x1] %vm86, %v85
    // Predicated region
    $region10: #{tpu_custom_call.1} parent=1 // pred_check
      _
    $region11: #{tpu_custom_call.1} parent=1 // pred_check_branch
      %89 = sbr.rel (0) target = $region13
    $region12: #{tpu_custom_call.1} parent=1 // pred_region
      %s91 = ssub.s32 16, 16
      %92 = vsyncadd [#allocation3], %s91
      %s94 = sshll.u32 [#allocation2], 4
      %s95 = int_to_ptr.vmem [resolvable:$true] %s94
      %97 = dma.vmem_to_hbm [thread:$0]  %s95, 16, %s2, [#allocation3]
    $region13: #{tpu_custom_call.1} parent=1 // pred_fallthru
      _
    // Predicated region
    $region14: #{tpu_custom_call.1} parent=1 // pred_check
      _
    $region15: #{tpu_custom_call.1} parent=1 // pred_check_branch
      %99 = sbr.rel (0) target = $region17
    $region16: #{tpu_custom_call.1} parent=1 // pred_region
      %100 = dma.done [#allocation3], 16
    $region17: #{tpu_custom_call.1} parent=1 // pred_fallthru
      _
    %101 = vsyncpa [#allocation3], 1

</llo_original>
